<compile_context>
chip_gen: v7x
topology: tpu7x:2x2x1
jax: 0.10.0
libtpu: 0.0.40
codegen_flags: <defaults>
</compile_context>

<pallas_src>
import functools

import jax
import jax.numpy as jnp
from jax.experimental import pallas as pl
from jax.experimental.pallas import tpu as pltpu

SUBLANE = 8
_CAP_ROWS = 2048          # max batch rows per grid step (VMEM-safe everywhere)
_MIN_ROWS_PER_CORE = 512  # don't split across TensorCores below this


def _round_up(n, m):
    return ((n + m - 1) // m) * m


def _tpu_flavor():
    """Best-effort chip detection; conservative defaults if it fails.

    Returns (two_tensorcores, bf16_activation_path)."""
    kind = ""
    try:
        kind = jax.devices()[0].device_kind.lower()
    except Exception:  # pragma: no cover - detection is purely a perf hint
        pass
    two_tc = any(t in kind for t in ("v7", "v4", "v5p"))
    bf16_act = any(t in kind for t in ("v6", "v7"))
    return two_tc, bf16_act


def _choose_block_b(batch, two_tensorcores):
    """Pick the batch tile.

    - Small batches: a single grid step covering the whole batch (block dims
      equal the full array dims, so no (8,128) padding is ever needed and
      there is only one 0.35us pipeline step).
    - Two-TensorCore chips with >= 2*512 rows: split into ~2 steps (multiple
      of 256 rows) so both cores get work via dimension_semantics=parallel.
    - Large batches: cap at _CAP_ROWS rows per step.
    """
    if two_tensorcores and batch >= 2 * _MIN_ROWS_PER_CORE:
        return min(_CAP_ROWS, _round_up(-(-batch // 2), 256))
    return min(batch, _CAP_ROWS)


def mlp_kernel(x_ref, w1_ref, b1_ref, w2_ref, b2_ref, w3_ref, b3_ref, o_ref,
               *, act_dtype):
    cd = w1_ref.dtype           # MXU operand dtype (f32 or bf16)
    f32 = jnp.float32

    # In-kernel cast of the x tile (no wrapper-side extra HBM pass over x).
    x = x_ref[...].astype(cd)

    # fc1 -> tanh.  Accumulate + bias in f32; tanh in act_dtype (bf16 only on
    # chips with a bf16 VPU/EUP path), result fed to the next MXU op as `cd`.
    h = jnp.dot(x, w1_ref[...], preferred_element_type=f32) + b1_ref[...]
    h = jnp.tanh(h.astype(act_dtype)).astype(cd)

    # fc2 -> tanh
    h = jnp.dot(h, w2_ref[...], preferred_element_type=f32) + b2_ref[...]
    h = jnp.tanh(h.astype(act_dtype)).astype(cd)

    # out (no activation); written unpadded — the 16-wide block equals the
    # full output width, so no lane padding / post-call slice is needed.
    o = jnp.dot(h, w3_ref[...], preferred_element_type=f32) + b3_ref[...]
    o_ref[...] = o.astype(o_ref.dtype)


@functools.partial(jax.jit, static_argnames=("compute_dtype", "block_b"))
def mlp_forward(x, w1, b1, w2, b2, w3, b3, *, compute_dtype=None, block_b=None):
    B, in_dim = x.shape
    h1_dim = w1.shape[1]
    h2_dim = w2.shape[1]
    out_dim = w3.shape[1]
    out_dtype = x.dtype

    two_tc, bf16_act_path = _tpu_flavor()

    # --- batch tiling: no padding of x; ragged tails are handled by the
    #     pipeline (padded loads, masked stores), and batch rows are
    #     independent so tail garbage never leaks into valid rows.
    if block_b is None:
        block_b = _choose_block_b(B, two_tc)
    else:
        if block_b <= 0:
            raise ValueError("block_b must be positive")
        block_b = min(block_b, B)
        if block_b < B and block_b % SUBLANE != 0:
            raise ValueError(
                "block_b must be a multiple of 8 (sublanes) when it tiles the batch"
            )
    grid = (pl.cdiv(B, block_b),)

    # --- optional reduced-precision MXU operands.  Weights are tiny (~74K
    #     params), so casting them in the wrapper is negligible; x is cast
    #     inside the kernel.  Biases and accumulation stay f32.
    use_bf16 = (
        compute_dtype is not None
        and jnp.dtype(compute_dtype) == jnp.dtype(jnp.bfloat16)
    )
    if compute_dtype is not None:
        w1 = w1.astype(compute_dtype)
        w2 = w2.astype(compute_dtype)
        w3 = w3.astype(compute_dtype)
    act_dtype = jnp.bfloat16 if (use_bf16 and bf16_act_path) else jnp.float32

    flops = 2 * B * (in_dim * h1_dim + h1_dim * h2_dim + h2_dim * out_dim)
    transcendentals = B * (h1_dim + h2_dim)
    bytes_accessed = (
        x.size * x.dtype.itemsize
        + w1.size * w1.dtype.itemsize + b1.size * b1.dtype.itemsize
        + w2.size * w2.dtype.itemsize + b2.size * b2.dtype.itemsize
        + w3.size * w3.dtype.itemsize + b3.size * b3.dtype.itemsize
        + B * out_dim * jnp.dtype(out_dtype).itemsize
    )

    kernel = functools.partial(mlp_kernel, act_dtype=act_dtype)

    out = pl.pallas_call(
        kernel,
        out_shape=jax.ShapeDtypeStruct((B, out_dim), out_dtype),
        grid_spec=pltpu.PrefetchScalarGridSpec(
            num_scalar_prefetch=0,
            grid=grid,
            in_specs=[
                pl.BlockSpec((block_b, in_dim), lambda i: (i, 0)),   # x tile
                # Constant index_map -> weights/biases fetched once, resident
                # across grid steps.
                pl.BlockSpec((in_dim, h1_dim), lambda i: (0, 0)),    # W1
                pl.BlockSpec((1, h1_dim), lambda i: (0, 0)),         # b1 (f32)
                pl.BlockSpec((h1_dim, h2_dim), lambda i: (0, 0)),    # W2
                pl.BlockSpec((1, h2_dim), lambda i: (0, 0)),         # b2 (f32)
                pl.BlockSpec((h2_dim, out_dim), lambda i: (0, 0)),   # W3
                pl.BlockSpec((1, out_dim), lambda i: (0, 0)),        # b3 (f32)
            ],
            out_specs=pl.BlockSpec((block_b, out_dim), lambda i: (i, 0)),
        ),
        compiler_params=pltpu.CompilerParams(
            dimension_semantics=("parallel",),
        ),
        cost_estimate=pl.CostEstimate(
            flops=flops,
            transcendentals=transcendentals,
            bytes_accessed=bytes_accessed,
        ),
    )(x, w1, b1, w2, b2, w3, b3)

    return out


def init_linear(key, fan_in, fan_out, dtype=jnp.float32):
    """Deterministic init matching torch.nn.Linear's U(-1/sqrt(fan_in), 1/sqrt(fan_in))."""
    kw, kb = jax.random.split(key)
    bound = 1.0 / jnp.sqrt(jnp.float32(fan_in))
    # Stored as (in, out) so the kernel computes x @ W + b.
    w = jax.random.uniform(kw, (fan_in, fan_out), dtype, minval=-bound, maxval=bound)
    b = jax.random.uniform(kb, (1, fan_out), dtype, minval=-bound, maxval=bound)
    return w, b


def _reference(x, w1, b1, w2, b2, w3, b3):
    h = jnp.tanh(x @ w1 + b1)
    h = jnp.tanh(h @ w2 + b2)
    return h @ w3 + b3


if __name__ == "__main__":
    key = jax.random.PRNGKey(0)
    k_x, k_x2, k_x3, k1, k2, k3 = jax.random.split(key, 6)

    input_size = 32
    output_size = 16

    w1, b1 = init_linear(k1, input_size, 256)
    w2, b2 = init_linear(k2, 256, 128)
    w3, b3 = init_linear(k3, 128, output_size)

    # --- Test 1: small batch, single grid step, f32 path, strict tolerance.
    batch = 8
    x = jax.random.normal(k_x, (batch, input_size), jnp.float32)
    out = mlp_forward(x, w1, b1, w2, b2, w3, b3)
    jax.block_until_ready(out)
    ref = _reference(x, w1, b1, w2, b2, w3, b3)
    assert out.shape == (batch, output_size)
    assert jnp.allclose(out, ref, atol=1e-5, rtol=1e-5)

    # --- Test 2: explicit small tile with a ragged tail (300 = 2*128 + 44):
    #     exercises the multi-step parallel grid and masked tail store with
    #     no wrapper-side padding or post-call slicing.
    batch2 = 300
    x2 = jax.random.normal(k_x2, (batch2, input_size), jnp.float32)
    out2 = mlp_forward(x2, w1, b1, w2, b2, w3, b3, block_b=128)
    jax.block_until_ready(out2)
    ref2 = _reference(x2, w1, b1, w2, b2, w3, b3)
    assert out2.shape == (batch2, output_size)
    assert jnp.allclose(out2, ref2, atol=1e-5, rtol=1e-5)

    # --- Test 3: bf16 MXU operands (in-kernel x cast; bf16 tanh only where the
    #     chip has a bf16 VPU/EUP path); accumulation stays f32.  Loose
    #     tolerance because operands are rounded to bf16.
    batch3 = 40
    x3 = jax.random.normal(k_x3, (batch3, input_size), jnp.float32)
    out_bf16 = mlp_forward(x3, w1, b1, w2, b2, w3, b3, compute_dtype=jnp.bfloat16)
    jax.block_until_ready(out_bf16)
    ref3 = _reference(x3, w1, b1, w2, b2, w3, b3)
    assert out_bf16.shape == (batch3, output_size)
    assert jnp.allclose(out_bf16, ref3, atol=1e-1, rtol=1e-1)

    print("KERNEL_OK")
</pallas_src>

<mosaic_0001>
module attributes {stable_mosaic.version = 11 : i64} {
  func.func @mlp_kernel(%arg0: i32, %arg1: memref<8x32xf32, #tpu.memory_space<vmem>>, %arg2: memref<32x256xf32, #tpu.memory_space<vmem>>, %arg3: memref<1x256xf32, #tpu.memory_space<vmem>>, %arg4: memref<256x128xf32, #tpu.memory_space<vmem>>, %arg5: memref<1x128xf32, #tpu.memory_space<vmem>>, %arg6: memref<128x16xf32, #tpu.memory_space<vmem>>, %arg7: memref<1x16xf32, #tpu.memory_space<vmem>>, %arg8: memref<8x16xf32, #tpu.memory_space<vmem>>) attributes {dimension_semantics = [#tpu.dimension_semantics<parallel>], iteration_bounds = array<i64: 1>, scalar_prefetch = 0 : i64, scratch_operands = 0 : i64, tpu.core_type = #tpu.core_type<tc>, window_params = [{transform_indices = @transform_0, window_bounds = array<i64: 8, 32>}, {pipeline_mode = #tpu.pipeline_mode<synchronous>, transform_indices = @transform_1, window_bounds = array<i64: 32, 256>}, {pipeline_mode = #tpu.pipeline_mode<synchronous>, transform_indices = @transform_2, window_bounds = array<i64: 1, 256>}, {pipeline_mode = #tpu.pipeline_mode<synchronous>, transform_indices = @transform_3, window_bounds = array<i64: 256, 128>}, {pipeline_mode = #tpu.pipeline_mode<synchronous>, transform_indices = @transform_4, window_bounds = array<i64: 1, 128>}, {pipeline_mode = #tpu.pipeline_mode<synchronous>, transform_indices = @transform_5, window_bounds = array<i64: 128, 16>}, {pipeline_mode = #tpu.pipeline_mode<synchronous>, transform_indices = @transform_6, window_bounds = array<i64: 1, 16>}, {transform_indices = @transform_7, window_bounds = array<i64: 8, 16>}]} {
    %c0 = arith.constant 0 : index
    %c0_0 = arith.constant 0 : index
    %0 = vector.load %arg1[%c0, %c0_0] : memref<8x32xf32, #tpu.memory_space<vmem>>, vector<8x32xf32>
    %c0_1 = arith.constant 0 : index
    %c0_2 = arith.constant 0 : index
    %1 = vector.load %arg2[%c0_1, %c0_2] : memref<32x256xf32, #tpu.memory_space<vmem>>, vector<32x256xf32>
    %cst = arith.constant dense<0.000000e+00> : vector<8x256xf32>
    %2 = tpu.matmul %0, %1, %cst {dimension_numbers = #tpu.dot_dimension_numbers<[1], [0], [0], [1], [0, 0, 1, 1], [], []>} : vector<8x32xf32>, vector<32x256xf32>, vector<8x256xf32> -> vector<8x256xf32>
    %c0_3 = arith.constant 0 : index
    %c0_4 = arith.constant 0 : index
    %3 = vector.load %arg3[%c0_3, %c0_4] : memref<1x256xf32, #tpu.memory_space<vmem>>, vector<1x256xf32>
    %4 = vector.broadcast %3 : vector<1x256xf32> to vector<8x256xf32>
    %5 = arith.addf %2, %4 : vector<8x256xf32>
    %6 = math.tanh %5 : vector<8x256xf32>
    %c0_5 = arith.constant 0 : index
    %c0_6 = arith.constant 0 : index
    %7 = vector.load %arg4[%c0_5, %c0_6] : memref<256x128xf32, #tpu.memory_space<vmem>>, vector<256x128xf32>
    %cst_7 = arith.constant dense<0.000000e+00> : vector<8x128xf32>
    %8 = tpu.matmul %6, %7, %cst_7 {dimension_numbers = #tpu.dot_dimension_numbers<[1], [0], [0], [1], [0, 0, 1, 1], [], []>} : vector<8x256xf32>, vector<256x128xf32>, vector<8x128xf32> -> vector<8x128xf32>
    %c0_8 = arith.constant 0 : index
    %c0_9 = arith.constant 0 : index
    %9 = vector.load %arg5[%c0_8, %c0_9] : memref<1x128xf32, #tpu.memory_space<vmem>>, vector<1x128xf32>
    %10 = vector.broadcast %9 : vector<1x128xf32> to vector<8x128xf32>
    %11 = arith.addf %8, %10 : vector<8x128xf32>
    %12 = math.tanh %11 : vector<8x128xf32>
    %c0_10 = arith.constant 0 : index
    %c0_11 = arith.constant 0 : index
    %13 = vector.load %arg6[%c0_10, %c0_11] : memref<128x16xf32, #tpu.memory_space<vmem>>, vector<128x16xf32>
    %cst_12 = arith.constant dense<0.000000e+00> : vector<8x16xf32>
    %14 = tpu.matmul %12, %13, %cst_12 {dimension_numbers = #tpu.dot_dimension_numbers<[1], [0], [0], [1], [0, 0, 1, 1], [], []>} : vector<8x128xf32>, vector<128x16xf32>, vector<8x16xf32> -> vector<8x16xf32>
    %c0_13 = arith.constant 0 : index
    %c0_14 = arith.constant 0 : index
    %15 = vector.load %arg7[%c0_13, %c0_14] : memref<1x16xf32, #tpu.memory_space<vmem>>, vector<1x16xf32>
    %16 = vector.broadcast %15 : vector<1x16xf32> to vector<8x16xf32>
    %17 = arith.addf %14, %16 : vector<8x16xf32>
    %c0_15 = arith.constant 0 : index
    %c0_16 = arith.constant 0 : index
    %18 = vector.load %arg8[%c0_15, %c0_16] : memref<8x16xf32, #tpu.memory_space<vmem>>, vector<8x16xf32>
    tpu.vector_store %arg8[%c0_15, %c0_16], %17 {strides = array<i32>} : memref<8x16xf32, #tpu.memory_space<vmem>>, vector<8x16xf32>,
    return
  }
  func.func @transform_0(%arg0: i32) -> (i32, i32) {
    %c0_i32 = arith.constant 0 : i32
    %c0_i32_0 = arith.constant 0 : i32
    return %arg0, %c0_i32 : i32, i32
  }
  func.func @transform_1(%arg0: i32) -> (i32, i32) {
    %c0_i32 = arith.constant 0 : i32
    %c0_i32_0 = arith.constant 0 : i32
    %c0_i32_1 = arith.constant 0 : i32
    return %c0_i32, %c0_i32_0 : i32, i32
  }
  func.func @transform_2(%arg0: i32) -> (i32, i32) {
    %c0_i32 = arith.constant 0 : i32
    %c0_i32_0 = arith.constant 0 : i32
    %c0_i32_1 = arith.constant 0 : i32
    return %c0_i32, %c0_i32_0 : i32, i32
  }
  func.func @transform_3(%arg0: i32) -> (i32, i32) {
    %c0_i32 = arith.constant 0 : i32
    %c0_i32_0 = arith.constant 0 : i32
    %c0_i32_1 = arith.constant 0 : i32
    return %c0_i32, %c0_i32_0 : i32, i32
  }
  func.func @transform_4(%arg0: i32) -> (i32, i32) {
    %c0_i32 = arith.constant 0 : i32
    %c0_i32_0 = arith.constant 0 : i32
    %c0_i32_1 = arith.constant 0 : i32
    return %c0_i32, %c0_i32_0 : i32, i32
  }
  func.func @transform_5(%arg0: i32) -> (i32, i32) {
    %c0_i32 = arith.constant 0 : i32
    %c0_i32_0 = arith.constant 0 : i32
    %c0_i32_1 = arith.constant 0 : i32
    return %c0_i32, %c0_i32_0 : i32, i32
  }
  func.func @transform_6(%arg0: i32) -> (i32, i32) {
    %c0_i32 = arith.constant 0 : i32
    %c0_i32_0 = arith.constant 0 : i32
    %c0_i32_1 = arith.constant 0 : i32
    return %c0_i32, %c0_i32_0 : i32, i32
  }
  func.func @transform_7(%arg0: i32) -> (i32, i32) {
    %c0_i32 = arith.constant 0 : i32
    %c0_i32_0 = arith.constant 0 : i32
    return %arg0, %c0_i32 : i32, i32
  }
}

</mosaic_0001>

<llo_original>
// kernel: mlp_forward.1
$region0: #{mlp_forward.1}
  #allocation0 [shape = 'u32[]', space=smem, size = 0x4, offset = 0x4, fixed_abs, tag = 'smem constant byte address 0x4 - core index']
  #allocation1 [shape = 'u32[144,128]{1,0:T(1,128)}', space=vmem, size = 0x12000, scoped, tag = 'internal scratch']
  %s0 = inlined_call_operand.vmem [shape: f32[8,32], index: 0, kind: input, shape index: {}]
  %s1 = inlined_call_operand.vmem [shape: f32[32,256], index: 1, kind: input, shape index: {}]
  %s2 = inlined_call_operand.vmem [shape: f32[1,256], index: 2, kind: input, shape index: {}]
  %s3 = inlined_call_operand.hbm [shape: f32[256,128], index: 3, kind: input, shape index: {}]
  %s4 = inlined_call_operand.vmem [shape: f32[1,128], index: 4, kind: input, shape index: {}]
  %s5 = inlined_call_operand.vmem [shape: f32[128,16], index: 5, kind: input, shape index: {}]
  %s6 = inlined_call_operand.vmem [shape: f32[1,16], index: 6, kind: input, shape index: {}]
  %s7 = inlined_call_operand.hbm [shape: f32[8,16], index: 7, kind: output, shape index: {}]
  %s8 = sld [smem:[#allocation0]]
  $region42: #{mlp_forward.1} parent=0
    _
  %s10 = ssub.s32 1, %s8
  %s11 = scalar_select 0, %s10, %s8
  $region1: #{mlp_forward.1} parent=0
    #allocation2 [shape = 'u8[131072]{0}', space=vmem, size = 0x20000, scoped, tag = 'input window, operand 3, single buffered']
    #allocation3 [shape = 's32[1]{0}', space=sflag, size = 0x4, scoped, tag = 'scoped memory for mlp_forward.1']
    #allocation4 [shape = 's32[1]{0}', space=sflag, size = 0x4, scoped, tag = 'scoped memory for mlp_forward.1']
    #allocation5 [shape = 'u8[4096]{0}', space=vmem, size = 0x1000, scoped, tag = 'output window, operand 0, single buffered']
    %12 = vsyncpa [#allocation3], 0
    %13 = vsyncpa [#allocation4], 0
    // Predicated region
    $region2: #{mlp_forward.1} parent=1 // pred_check
      _
    $region3: #{mlp_forward.1} parent=1 // pred_check_branch
      %15 = sbr.rel (0) target = $region5
    $region4: #{mlp_forward.1} parent=1 // pred_region
      _
    $region5: #{mlp_forward.1} parent=1 // pred_fallthru
      _
    // Predicated region
    $region6: #{mlp_forward.1} parent=1 // pred_check
      _
    $region7: #{mlp_forward.1} parent=1 // pred_check_branch
      %17 = sbr.rel (0) target = $region9
    $region8: #{mlp_forward.1} parent=1 // pred_region
      _
    $region9: #{mlp_forward.1} parent=1 // pred_fallthru
      _
    // Predicated region
    $region10: #{mlp_forward.1} parent=1 // pred_check
      _
    $region11: #{mlp_forward.1} parent=1 // pred_check_branch
      %19 = sbr.rel (0) target = $region13
    $region12: #{mlp_forward.1} parent=1 // pred_region
      _
    $region13: #{mlp_forward.1} parent=1 // pred_fallthru
      _
    // Predicated region
    $region14: #{mlp_forward.1} parent=1 // pred_check
      _
    $region15: #{mlp_forward.1} parent=1 // pred_check_branch
      %21 = sbr.rel (0) target = $region17
    $region16: #{mlp_forward.1} parent=1 // pred_region
      %s23 = ssub.s32 4096, 4096
      %24 = vsyncadd [#allocation3], %s23
      %s25 = sshll.u32 [#allocation2], 4
      %s26 = int_to_ptr.vmem [resolvable:$true] %s25
      %31 = dma.hbm_to_vmem [thread:$0]  %s3, 4096, %s26, [#allocation3], 128, 128, 8
    $region17: #{mlp_forward.1} parent=1 // pred_fallthru
      _
    // Predicated region
    $region18: #{mlp_forward.1} parent=1 // pred_check
      _
    $region19: #{mlp_forward.1} parent=1 // pred_check_branch
      %33 = sbr.rel (0) target = $region21
    $region20: #{mlp_forward.1} parent=1 // pred_region
      _
    $region21: #{mlp_forward.1} parent=1 // pred_fallthru
      _
    // Predicated region
    $region22: #{mlp_forward.1} parent=1 // pred_check
      _
    $region23: #{mlp_forward.1} parent=1 // pred_check_branch
      %35 = sbr.rel (0) target = $region25
    $region24: #{mlp_forward.1} parent=1 // pred_region
      _
    $region25: #{mlp_forward.1} parent=1 // pred_fallthru
      _
    // Predicated region
    $region26: #{mlp_forward.1} parent=1 // pred_check
      _
    $region27: #{mlp_forward.1} parent=1 // pred_check_branch
      %37 = sbr.rel (0) target = $region29
    $region28: #{mlp_forward.1} parent=1 // pred_region
      _
    $region29: #{mlp_forward.1} parent=1 // pred_fallthru
      _
    // Predicated region
    $region30: #{mlp_forward.1} parent=1 // pred_check
      _
    $region31: #{mlp_forward.1} parent=1 // pred_check_branch
      %39 = sbr.rel (0) target = $region33
    $region32: #{mlp_forward.1} parent=1 // pred_region
      %40 = dma.done [#allocation3], 4096
    $region33: #{mlp_forward.1} parent=1 // pred_fallthru
      _
    %v41 = vld [vmem:[%s0] sm:$0xff]
    %v42 = vld [vmem:[%s1] sm:$0xff]
    %v43 = vld [vmem:[%s1 + $0x8] sm:$0xff]
    %v44 = vld [vmem:[%s1 + $0x10] sm:$0xff]
    %v45 = vld [vmem:[%s1 + $0x18] sm:$0xff]
    %v46 = vld [vmem:[%s1 + $0x20] sm:$0xff]
    %v47 = vld [vmem:[%s1 + $0x28] sm:$0xff]
    %v48 = vld [vmem:[%s1 + $0x30] sm:$0xff]
    %v49 = vld [vmem:[%s1 + $0x38] sm:$0xff]
    %v50 = vld [vmem:[%s2] sm:$0x3]
    %v52 = vlaneseq
    %v53 = vshrl.u32 %v52, 7
    %v54 = vsub.s32 0, %v53
    %v55 = vrot.slane %v50, %v54
    %v56 = vlaneseq
    %v57 = vshrl.u32 %v56, 7
    %v58 = vsub.s32 1, %v57
    %v59 = vrot.slane %v50, %v58
    %vm62 = vcmask 261120
    %v64 = vsel %vm62, %v41, 0
    %66 = vmatprep.subr.mxu0 %v43
    %67 = vmatpush1.msra.mxu0 %v42
    %68 = vmatprep.subr.mxu0 %v45
    %69 = vmatpush1.msra.mxu0 %v44
    %70 = vmatprep.subr.mxu0 %v47
    %71 = vmatpush1.msra.mxu0 %v46
    %72 = vmatprep.subr.mxu0 %v49
    %73 = vmatpush1.msra.mxu0 %v48
    %74 = vmatprep.subr.mxu0 0.0
    %75 = vmatpush1.msra.mxu0 0.0
    %76 = vmatprep.subr.mxu0 0.0
    %77 = vmatpush1.msra.mxu0 0.0
    %78 = vmatprep.subr.mxu0 0.0
    %79 = vmatpush1.msra.mxu0 0.0
    %80 = vmatprep.subr.mxu0 0.0
    %81 = vmatpush1.msra.mxu0 0.0
    %82 = vmatprep.subr.mxu0 0.0
    %83 = vmatpush1.msra.mxu0 0.0
    %84 = vmatprep.subr.mxu0 0.0
    %85 = vmatpush1.msra.mxu0 0.0
    %86 = vmatprep.subr.mxu0 0.0
    %87 = vmatpush1.msra.mxu0 0.0
    %88 = vmatprep.subr.mxu0 0.0
    %89 = vmatpush1.msra.mxu0 0.0
    %90 = vmatprep.subr.mxu0 0.0
    %91 = vmatpush1.msra.mxu0 0.0
    %92 = vmatprep.subr.mxu0 0.0
    %93 = vmatpush1.msra.mxu0 0.0
    %94 = vmatprep.subr.mxu0 0.0
    %95 = vmatpush1.msra.mxu0 0.0
    %96 = vmatprep.subr.mxu0 0.0
    %97 = vmatpush1.msra.mxu0 0.0
    %98 = vmatprep.subr.mxu0 0.0
    %99 = vmatpush1.msra.mxu0 0.0
    %100 = vmatprep.subr.mxu0 0.0
    %101 = vmatpush1.msra.mxu0 0.0
    %102 = vmatprep.subr.mxu0 0.0
    %103 = vmatpush1.msra.mxu0 0.0
    %104 = vmatprep.subr.mxu0 0.0
    %105 = vmatpush1.msra.mxu0 0.0
    %106 = vmatprep.subr.mxu0 0.0
    %107 = vmatpush1.msra.mxu0 0.0
    %108 = vmatprep.subr.mxu0 0.0
    %109 = vmatpush1.msra.mxu0 0.0
    %110 = vmatprep.subr.mxu0 0.0
    %111 = vmatpush1.msra.mxu0 0.0
    %112 = vmatprep.subr.mxu0 0.0
    %113 = vmatpush1.msra.mxu0 0.0
    %114 = vmatprep.subr.mxu0 0.0
    %115 = vmatpush1.msra.mxu0 0.0
    %116 = vmatprep.subr.mxu0 0.0
    %117 = vmatpush1.msra.mxu0 0.0
    %118 = vmatprep.subr.mxu0 0.0
    %119 = vmatpush1.msra.mxu0 0.0
    %120 = vmatprep.subr.mxu0 0.0
    %121 = vmatpush1.msra.mxu0 0.0
    %122 = vmatprep.subr.mxu0 0.0
    %123 = vmatpush1.msra.mxu0 0.0
    %124 = vmatprep.subr.mxu0 0.0
    %125 = vmatpush1.msra.mxu0 0.0
    %126 = vmatprep.subr.mxu0 0.0
    %127 = vmatpush1.msra.mxu0 0.0
    %128 = vmatprep.subr.mxu0 0.0
    %129 = vmatpush1.msra.mxu0 0.0
    %130 = vmatprep.mubr.f32.mxu0 0.0
    %131 = vmatmul.mubr.f32.gmra.mrb[0].mxu0 %v64
    %v132 = vpop.f32.mrb[0].mxu0
    %v133 = vadd.f32 %v55, %v132
    %v134 = vpop.f32.mrb[0].mxu0
    %v135 = vadd.f32 %v59, %v134
    %136 = vdwg.mxu0
    %v137 = vtanh.pop %v133
    %v138 = vtanh.pop %v135
    %v139 = vld [vmem:[#allocation2] sm:$0xff]
    %v140 = vld [vmem:[#allocation2 + $0x8] sm:$0xff]
    %v141 = vld [vmem:[#allocation2 + $0x10] sm:$0xff]
    %v142 = vld [vmem:[#allocation2 + $0x18] sm:$0xff]
    %v143 = vld [vmem:[#allocation2 + $0x20] sm:$0xff]
    %v144 = vld [vmem:[#allocation2 + $0x28] sm:$0xff]
    %v145 = vld [vmem:[#allocation2 + $0x30] sm:$0xff]
    %v146 = vld [vmem:[#allocation2 + $0x38] sm:$0xff]
    %v147 = vld [vmem:[#allocation2 + $0x40] sm:$0xff]
    %v148 = vld [vmem:[#allocation2 + $0x48] sm:$0xff]
    %v149 = vld [vmem:[#allocation2 + $0x50] sm:$0xff]
    %v150 = vld [vmem:[#allocation2 + $0x58] sm:$0xff]
    %v151 = vld [vmem:[#allocation2 + $0x60] sm:$0xff]
    %v152 = vld [vmem:[#allocation2 + $0x68] sm:$0xff]
    %v153 = vld [vmem:[#allocation2 + $0x70] sm:$0xff]
    %v154 = vld [vmem:[#allocation2 + $0x78] sm:$0xff]
    %v155 = vld [vmem:[#allocation2 + $0x80] sm:$0xff]
    %v156 = vld [vmem:[#allocation2 + $0x88] sm:$0xff]
    %v157 = vld [vmem:[#allocation2 + $0x90] sm:$0xff]
    %v158 = vld [vmem:[#allocation2 + $0x98] sm:$0xff]
    %v159 = vld [vmem:[#allocation2 + $0xa0] sm:$0xff]
    %v160 = vld [vmem:[#allocation2 + $0xa8] sm:$0xff]
    %v161 = vld [vmem:[#allocation2 + $0xb0] sm:$0xff]
    %v162 = vld [vmem:[#allocation2 + $0xb8] sm:$0xff]
    %v163 = vld [vmem:[#allocation2 + $0xc0] sm:$0xff]
    %v164 = vld [vmem:[#allocation2 + $0xc8] sm:$0xff]
    %v165 = vld [vmem:[#allocation2 + $0xd0] sm:$0xff]
    %v166 = vld [vmem:[#allocation2 + $0xd8] sm:$0xff]
    %v167 = vld [vmem:[#allocation2 + $0xe0] sm:$0xff]
    %v168 = vld [vmem:[#allocation2 + $0xe8] sm:$0xff]
    %v169 = vld [vmem:[#allocation2 + $0xf0] sm:$0xff]
    %v170 = vld [vmem:[#allocation2 + $0xf8] sm:$0xff]
    %v171 = vld [vmem:[%s4] sm:$0x1]
    %v173 = vlaneseq
    %v174 = vshrl.u32 %v173, 7
    %v175 = vsub.s32 0, %v174
    %v176 = vrot.slane %v171, %v175
    %178 = vmatprep.subr.mxu0 0.0
    %179 = vmatpush1.msra.mxu0 %v139
    %180 = vmatprep.subr.mxu0 0.0
    %181 = vmatpush1.msra.mxu0 %v140
    %182 = vmatprep.subr.mxu0 0.0
    %183 = vmatpush1.msra.mxu0 %v141
    %184 = vmatprep.subr.mxu0 0.0
    %185 = vmatpush1.msra.mxu0 %v142
    %186 = vmatprep.subr.mxu0 0.0
    %187 = vmatpush1.msra.mxu0 %v143
    %188 = vmatprep.subr.mxu0 0.0
    %189 = vmatpush1.msra.mxu0 %v144
    %190 = vmatprep.subr.mxu0 0.0
    %191 = vmatpush1.msra.mxu0 %v145
    %192 = vmatprep.subr.mxu0 0.0
    %193 = vmatpush1.msra.mxu0 %v146
    %194 = vmatprep.subr.mxu0 0.0
    %195 = vmatpush1.msra.mxu0 %v147
    %196 = vmatprep.subr.mxu0 0.0
    %197 = vmatpush1.msra.mxu0 %v148
    %198 = vmatprep.subr.mxu0 0.0
    %199 = vmatpush1.msra.mxu0 %v149
    %200 = vmatprep.subr.mxu0 0.0
    %201 = vmatpush1.msra.mxu0 %v150
    %202 = vmatprep.subr.mxu0 0.0
    %203 = vmatpush1.msra.mxu0 %v151
    %204 = vmatprep.subr.mxu0 0.0
    %205 = vmatpush1.msra.mxu0 %v152
    %206 = vmatprep.subr.mxu0 0.0
    %207 = vmatpush1.msra.mxu0 %v153
    %208 = vmatprep.subr.mxu0 0.0
    %209 = vmatpush1.msra.mxu0 %v154
    %210 = vmatprep.subr.mxu0 0.0
    %211 = vmatpush1.msra.mxu0 %v155
    %212 = vmatprep.subr.mxu0 0.0
    %213 = vmatpush1.msra.mxu0 %v156
    %214 = vmatprep.subr.mxu0 0.0
    %215 = vmatpush1.msra.mxu0 %v157
    %216 = vmatprep.subr.mxu0 0.0
    %217 = vmatpush1.msra.mxu0 %v158
    %218 = vmatprep.subr.mxu0 0.0
    %219 = vmatpush1.msra.mxu0 %v159
    %220 = vmatprep.subr.mxu0 0.0
    %221 = vmatpush1.msra.mxu0 %v160
    %222 = vmatprep.subr.mxu0 0.0
    %223 = vmatpush1.msra.mxu0 %v161
    %224 = vmatprep.subr.mxu0 0.0
    %225 = vmatpush1.msra.mxu0 %v162
    %226 = vmatprep.subr.mxu0 0.0
    %227 = vmatpush1.msra.mxu0 %v163
    %228 = vmatprep.subr.mxu0 0.0
    %229 = vmatpush1.msra.mxu0 %v164
    %230 = vmatprep.subr.mxu0 0.0
    %231 = vmatpush1.msra.mxu0 %v165
    %232 = vmatprep.subr.mxu0 0.0
    %233 = vmatpush1.msra.mxu0 %v166
    %234 = vmatprep.subr.mxu0 0.0
    %235 = vmatpush1.msra.mxu0 %v167
    %236 = vmatprep.subr.mxu0 0.0
    %237 = vmatpush1.msra.mxu0 %v168
    %238 = vmatprep.subr.mxu0 0.0
    %239 = vmatpush1.msra.mxu0 %v169
    %240 = vmatprep.subr.mxu0 0.0
    %241 = vmatpush1.msra.mxu0 %v170
    %242 = vmatprep.mubr.f32.mxu0 %v138
    %243 = vmatmul.mubr.f32.gmra.mrb[0].mxu0 %v137
    %v244 = vpop.f32.mrb[0].mxu0
    %v245 = vadd.f32 %v176, %v244
    %v246 = vpop.f32.mrb[0].mxu0
    %247 = vdwg.mxu0
    %v248 = vtanh.pop %v245
    %v249 = vld [vmem:[%s5] sm:$0xff]
    %v250 = vld [vmem:[%s5 + $0x8] sm:$0xff]
    %v251 = vld [vmem:[%s5 + $0x10] sm:$0xff]
    %v252 = vld [vmem:[%s5 + $0x18] sm:$0xff]
    %v253 = vld [vmem:[%s5 + $0x20] sm:$0xff]
    %v254 = vld [vmem:[%s5 + $0x28] sm:$0xff]
    %v255 = vld [vmem:[%s5 + $0x30] sm:$0xff]
    %v256 = vld [vmem:[%s5 + $0x38] sm:$0xff]
    %v257 = vld [vmem:[%s5 + $0x40] sm:$0xff]
    %v258 = vld [vmem:[%s5 + $0x48] sm:$0xff]
    %v259 = vld [vmem:[%s5 + $0x50] sm:$0xff]
    %v260 = vld [vmem:[%s5 + $0x58] sm:$0xff]
    %v261 = vld [vmem:[%s5 + $0x60] sm:$0xff]
    %v262 = vld [vmem:[%s5 + $0x68] sm:$0xff]
    %v263 = vld [vmem:[%s5 + $0x70] sm:$0xff]
    %v264 = vld [vmem:[%s5 + $0x78] sm:$0xff]
    %v265 = vld [vmem:[%s6] sm:$0x1]
    %v267 = vlaneseq
    %v268 = vshrl.u32 %v267, 7
    %v269 = vsub.s32 0, %v268
    %v270 = vrot.slane %v265, %v269
    %272 = vmatprep.subr.mxu0 0.0
    %273 = vmatpush1.msra.mxu0 %v249
    %274 = vmatprep.subr.mxu0 0.0
    %275 = vmatpush1.msra.mxu0 %v250
    %276 = vmatprep.subr.mxu0 0.0
    %277 = vmatpush1.msra.mxu0 %v251
    %278 = vmatprep.subr.mxu0 0.0
    %279 = vmatpush1.msra.mxu0 %v252
    %280 = vmatprep.subr.mxu0 0.0
    %281 = vmatpush1.msra.mxu0 %v253
    %282 = vmatprep.subr.mxu0 0.0
    %283 = vmatpush1.msra.mxu0 %v254
    %284 = vmatprep.subr.mxu0 0.0
    %285 = vmatpush1.msra.mxu0 %v255
    %286 = vmatprep.subr.mxu0 0.0
    %287 = vmatpush1.msra.mxu0 %v256
    %288 = vmatprep.subr.mxu0 0.0
    %289 = vmatpush1.msra.mxu0 %v257
    %290 = vmatprep.subr.mxu0 0.0
    %291 = vmatpush1.msra.mxu0 %v258
    %292 = vmatprep.subr.mxu0 0.0
    %293 = vmatpush1.msra.mxu0 %v259
    %294 = vmatprep.subr.mxu0 0.0
    %295 = vmatpush1.msra.mxu0 %v260
    %296 = vmatprep.subr.mxu0 0.0
    %297 = vmatpush1.msra.mxu0 %v261
    %298 = vmatprep.subr.mxu0 0.0
    %299 = vmatpush1.msra.mxu0 %v262
    %300 = vmatprep.subr.mxu0 0.0
    %301 = vmatpush1.msra.mxu0 %v263
    %302 = vmatprep.subr.mxu0 0.0
    %303 = vmatpush1.msra.mxu0 %v264
    %304 = vmatprep.subr.mxu0 0.0
    %305 = vmatpush1.msra.mxu0 0.0
    %306 = vmatprep.subr.mxu0 0.0
    %307 = vmatpush1.msra.mxu0 0.0
    %308 = vmatprep.subr.mxu0 0.0
    %309 = vmatpush1.msra.mxu0 0.0
    %310 = vmatprep.subr.mxu0 0.0
    %311 = vmatpush1.msra.mxu0 0.0
    %312 = vmatprep.subr.mxu0 0.0
    %313 = vmatpush1.msra.mxu0 0.0
    %314 = vmatprep.subr.mxu0 0.0
    %315 = vmatpush1.msra.mxu0 0.0
    %316 = vmatprep.subr.mxu0 0.0
    %317 = vmatpush1.msra.mxu0 0.0
    %318 = vmatprep.subr.mxu0 0.0
    %319 = vmatpush1.msra.mxu0 0.0
    %320 = vmatprep.subr.mxu0 0.0
    %321 = vmatpush1.msra.mxu0 0.0
    %322 = vmatprep.subr.mxu0 0.0
    %323 = vmatpush1.msra.mxu0 0.0
    %324 = vmatprep.subr.mxu0 0.0
    %325 = vmatpush1.msra.mxu0 0.0
    %326 = vmatprep.subr.mxu0 0.0
    %327 = vmatpush1.msra.mxu0 0.0
    %328 = vmatprep.subr.mxu0 0.0
    %329 = vmatpush1.msra.mxu0 0.0
    %330 = vmatprep.subr.mxu0 0.0
    %331 = vmatpush1.msra.mxu0 0.0
    %332 = vmatprep.subr.mxu0 0.0
    %333 = vmatpush1.msra.mxu0 0.0
    %334 = vmatprep.subr.mxu0 0.0
    %335 = vmatpush1.msra.mxu0 0.0
    %336 = vmatprep.mubr.f32.mxu0 0.0
    %337 = vmatmul.mubr.f32.gmra.mrb[0].mxu0 %v248
    %v338 = vpop.f32.mrb[0].mxu0
    %v339 = vadd.f32 %v270, %v338
    %v340 = vpop.f32.mrb[0].mxu0
    %341 = vdwg.mxu0
    %vm342 = vcmask 130048
    %343 = vst.msk [vmem:[#allocation5] sm:$0xff] %vm342, %v339
    // Predicated region
    $region34: #{mlp_forward.1} parent=1 // pred_check
      _
    $region35: #{mlp_forward.1} parent=1 // pred_check_branch
      %345 = sbr.rel (0) target = $region37
    $region36: #{mlp_forward.1} parent=1 // pred_region
      %s347 = ssub.s32 128, 128
      %348 = vsyncadd [#allocation4], %s347
      %s350 = sshll.u32 [#allocation5], 4
      %s351 = int_to_ptr.vmem [resolvable:$true] %s350
      %353 = dma.vmem_to_hbm [thread:$0]  %s351, 128, %s7, [#allocation4]
    $region37: #{mlp_forward.1} parent=1 // pred_fallthru
      _
    // Predicated region
    $region38: #{mlp_forward.1} parent=1 // pred_check
      _
    $region39: #{mlp_forward.1} parent=1 // pred_check_branch
      %355 = sbr.rel (0) target = $region41
    $region40: #{mlp_forward.1} parent=1 // pred_region
      %356 = dma.done [#allocation4], 128
    $region41: #{mlp_forward.1} parent=1 // pred_fallthru
      _
    %357 = vsyncpa [#allocation3], 1
    %358 = vsyncpa [#allocation4], 1

</llo_original>
